<compile_context>
chip_gen: v6e
topology: v6e:2x2x1
jax: 0.10.0
libtpu: 0.0.40
codegen_flags: <defaults>
</compile_context>

<pallas_src>
import functools

import numpy as np
import jax
import jax.numpy as jnp
from jax.experimental import pallas as pl
from jax.experimental.pallas import tpu as pltpu


# ---------------------------------------------------------------------------
# Deterministic "parameters" (same construction as the PyTorch __init__).
# Only used by the pure-JAX reference; the kernel uses the equivalent
# butterfly factorization (r1, r2, r3 are symmetric +/-1 butterfly stages).
# ---------------------------------------------------------------------------
_R1 = np.array(
    [[1, 0, 0, 0, 1, 0, 0, 0], [0, 1, 0, 0, 0, 1, 0, 0],
     [0, 0, 1, 0, 0, 0, 1, 0], [0, 0, 0, 1, 0, 0, 0, 1],
     [1, 0, 0, 0, -1, 0, 0, 0], [0, 1, 0, 0, 0, -1, 0, 0],
     [0, 0, 1, 0, 0, 0, -1, 0], [0, 0, 0, 1, 0, 0, 0, -1]], dtype=np.float32)
_R2 = np.array(
    [[1, 0, 1, 0, 0, 0, 0, 0], [0, 1, 0, 1, 0, 0, 0, 0],
     [1, 0, -1, 0, 0, 0, 0, 0], [0, 1, 0, -1, 0, 0, 0, 0],
     [0, 0, 0, 0, 1, 0, 1, 0], [0, 0, 0, 0, 0, 1, 0, 1],
     [0, 0, 0, 0, 1, 0, -1, 0], [0, 0, 0, 0, 0, 1, 0, -1]], dtype=np.float32)
_R3 = np.array(
    [[1, 1, 0, 0, 0, 0, 0, 0], [1, -1, 0, 0, 0, 0, 0, 0],
     [0, 0, 1, 1, 0, 0, 0, 0], [0, 0, 1, -1, 0, 0, 0, 0],
     [0, 0, 0, 0, 1, 1, 0, 0], [0, 0, 0, 0, 1, -1, 0, 0],
     [0, 0, 0, 0, 0, 0, 1, 1], [0, 0, 0, 0, 0, 0, 1, -1]], dtype=np.float32)

_LMUL = _R1.T @ _R2.T @ _R3.T          # 8x8 left multiplier  -- reference only
_RMUL = _R1 @ _R2 @ _R3                # 8x8 right multiplier -- reference only


# ---------------------------------------------------------------------------
# Kernel
# ---------------------------------------------------------------------------
def _lane_shift(x, amount):
    """Cyclic shift along axis 1: result[:, p] = x[:, (p - amount) % n]."""
    n = x.shape[1]
    amount = amount % n
    if amount == 0:
        return x
    if n % 128 == 0:
        return pltpu.roll(x, amount, axis=1)          # single XLU rotate
    # Fallback for lane widths that are not a multiple of 128.
    return jnp.concatenate([x[:, n - amount:], x[:, :n - amount]], axis=1)


def _satd_kernel(x_ref, y_ref, out_ref, *, w, strip_rows, n_strips, rows,
                 need_mask):
    block_rows, lanes = x_ref.shape

    # Lane-only selection masks, computed once and reused by every strip.
    lane = jax.lax.broadcasted_iota(jnp.int32, (1, lanes), 1)
    dists = (w, 2 * w, 4 * w, 4, 2)          # row stages then column stages
    masks = [(lane % (2 * d)) < d for d in dists]
    even = ((lane % 2) == 0).astype(jnp.float32)   # fused last-stage weight

    if need_mask:
        row_in_strip = jax.lax.broadcasted_iota(jnp.int32, (strip_rows, 1), 0)
        base_row = pl.program_id(0) * block_rows

    def strip_contrib(r0, xs, ys):
        # Diff in the native dtype (matches the PyTorch module), then f32.
        d = (xs - ys).astype(jnp.float32)
        if need_mask:
            valid = (base_row + r0 + row_in_strip) < rows
            d = jnp.where(valid, d, 0.0)
        # Five +/-1 butterfly stages (row dists w,2w,4w; column dists 4,2).
        for m, dist in zip(masks, dists):
            up = _lane_shift(d, lanes - dist)    # d[:, p + dist]
            down = _lane_shift(d, dist)          # d[:, p - dist]
            d = jnp.where(m, d + up, down - d)
        # Fused final column stage:  |a+b| + |a-b| = 2*max(|a|, |b|).
        a = jnp.abs(d)
        mx = jnp.maximum(a, _lane_shift(a, lanes - 1))   # max with next lane
        return jnp.sum(mx, axis=0, keepdims=True)

    if n_strips == 1:
        acc = strip_contrib(0, x_ref[...], y_ref[...])
    else:
        def body(s, acc):
            r0 = pl.multiple_of(s * strip_rows, 8)
            return acc + strip_contrib(
                r0,
                x_ref[pl.ds(r0, strip_rows), :],
                y_ref[pl.ds(r0, strip_rows), :])
        acc = jax.lax.fori_loop(0, n_strips, body,
                                jnp.zeros((1, lanes), jnp.float32))

    # Only even lanes carry counted values; the factor 2 lives in the wrapper.
    out_ref[0] = acc * even


# ---------------------------------------------------------------------------
# Wrapper
# ---------------------------------------------------------------------------
def _vmem_capacity_bytes():
    try:
        info = pltpu.get_tpu_info()
        cap = getattr(info, "vmem_capacity_bytes", None)
        if cap:
            return int(cap)
    except Exception:
        pass
    return 64 << 20      # conservative: v7x per-TensorCore capacity


def satd_loss(x, y, *, _max_block_rows=None, _strip_rows=None):
    """SATD loss of two NCHW tensors.  H and W must be multiples of 8."""
    assert x.shape == y.shape
    N, C, H, W = x.shape
    assert H % 8 == 0 and W % 8 == 0, "H and W must be multiples of 8"

    total_img_rows = N * C * H
    numel = N * C * H * W

    # Fold k image rows (k a multiple of 8, so 8-row transform groups never
    # straddle a fold) into the lane axis: lane-dense and, when the shape
    # allows, a multiple of 128 so every rotate is a plain lane rotation.
    k = 8
    while ((k * W < 128 or (k * W) % 128 != 0)
           and total_img_rows % (2 * k) == 0 and k < 128):
        k *= 2
    rows = total_img_rows // k
    lanes = k * W
    # Wrap-safety of the largest-distance (4W) butterfly stage.
    assert lanes % (8 * W) == 0

    xr = x.reshape(rows, lanes)
    yr = y.reshape(rows, lanes)

    itemsize = int(np.dtype(x.dtype).itemsize)

    # Generation-aware block budget: 2 inputs x 2 pipeline buffers per block
    # plus f32 strip intermediates must fit comfortably in per-core VMEM.
    vmem_cap = _vmem_capacity_bytes()
    target_in_block = max(lanes * 8 * itemsize, min(4 << 20, vmem_cap // 24))

    if rows <= 8:
        block_rows = rows
        strip_rows = rows
    else:
        budget_rows = max(8, (target_in_block // (lanes * itemsize)) // 8 * 8)
        # Prefer >= 2 grid steps so the parallel axis can use both v7x cores.
        half_rows = max(8, (((rows + 1) // 2) + 7) // 8 * 8)
        block_rows = min(budget_rows, half_rows)
        if _max_block_rows is not None:
            block_rows = max(8, min(block_rows, _max_block_rows // 8 * 8))
        strip_rows = min(128, block_rows)
        if _strip_rows is not None:
            strip_rows = max(8, min(block_rows, _strip_rows // 8 * 8))
        block_rows = max(strip_rows, block_rows // strip_rows * strip_rows)

    n_strips = block_rows // strip_rows
    grid = pl.cdiv(rows, block_rows)
    need_mask = (rows % block_rows) != 0

    in_block_bytes = block_rows * lanes * itemsize
    strip_bytes = strip_rows * lanes * 4
    vmem_needed = 4 * in_block_bytes + 12 * strip_bytes + (2 << 20)
    vmem_limit = int(min(int(vmem_cap * 0.9), max(32 << 20, vmem_needed)))

    partial = pl.pallas_call(
        functools.partial(_satd_kernel, w=W, strip_rows=strip_rows,
                          n_strips=n_strips, rows=rows, need_mask=need_mask),
        out_shape=jax.ShapeDtypeStruct((grid, 1, lanes), jnp.float32),
        grid_spec=pltpu.PrefetchScalarGridSpec(
            num_scalar_prefetch=0,
            grid=(grid,),
            in_specs=[
                pl.BlockSpec((block_rows, lanes), lambda i: (i, 0)),
                pl.BlockSpec((block_rows, lanes), lambda i: (i, 0)),
            ],
            out_specs=pl.BlockSpec((1, 1, lanes), lambda i: (i, 0, 0)),
        ),
        compiler_params=pltpu.CompilerParams(
            dimension_semantics=("parallel",),
            vmem_limit_bytes=vmem_limit,
        ),
    )(xr, yr)

    # Factor 2 comes from the |a+b|+|a-b| = 2*max(|a|,|b|) last-stage fusion.
    return jnp.sum(partial) * (2.0 / numel)


# ---------------------------------------------------------------------------
# Pure-JAX reference mirroring the PyTorch forward.
# ---------------------------------------------------------------------------
def _satd_loss_ref(x, y):
    N, C, H, W = x.shape
    diff = (x - y).astype(jnp.float32)
    lmul = jnp.asarray(_LMUL)
    rmul = jnp.asarray(_RMUL)
    blocks = diff.reshape(N, C, H // 8, 8, W // 8, 8)
    t = jnp.einsum("ab,ncibjd->nciajd", lmul, blocks,
                   precision=jax.lax.Precision.HIGHEST)
    t = jnp.einsum("nciajd,dk->nciajk", t, rmul,
                   precision=jax.lax.Precision.HIGHEST)
    return jnp.sum(jnp.abs(t)) / (N * C * H * W)


if __name__ == "__main__":
    def _check(shape, dtype, seed, tol, **kw):
        k1, k2 = jax.random.split(jax.random.PRNGKey(seed))
        xx = jax.random.normal(k1, shape, dtype=jnp.float32).astype(dtype)
        yy = jax.random.normal(k2, shape, dtype=jnp.float32).astype(dtype)
        got = jax.block_until_ready(satd_loss(xx, yy, **kw))
        want = jax.block_until_ready(_satd_loss_ref(xx, yy))
        assert np.allclose(np.asarray(got), np.asarray(want),
                           rtol=tol, atol=tol), (shape, dtype, got, want)

    # Primary shape implied by the module (NCHW with 8x8 transform blocks).
    _check((2, 4, 16, 16), jnp.float32, seed=0, tol=1e-4)
    # Ragged grid: exercises the cdiv grid + in-kernel tail-row masking.
    _check((2, 3, 32, 16), jnp.float32, seed=1, tol=1e-4, _max_block_rows=16)
    # Multi-strip accumulation path (fori_loop over row strips).
    _check((2, 4, 32, 16), jnp.float32, seed=2, tol=1e-4,
           _max_block_rows=16, _strip_rows=8)
    # Native low-precision streaming (diff taken in bf16, like the module).
    _check((1, 2, 16, 16), jnp.bfloat16, seed=3, tol=1e-2)

    print("KERNEL_OK")
</pallas_src>

<mosaic_0001>
module attributes {stable_mosaic.version = 11 : i64} {
  func.func @_satd_kernel(%arg0: i32, %arg1: memref<8x128xf32, #tpu.memory_space<vmem>>, %arg2: memref<8x128xf32, #tpu.memory_space<vmem>>, %arg3: memref<1x1x128xf32, #tpu.memory_space<vmem>>) attributes {dimension_semantics = [#tpu.dimension_semantics<parallel>], iteration_bounds = array<i64: 2>, scalar_prefetch = 0 : i64, scratch_operands = 0 : i64, tpu.core_type = #tpu.core_type<tc>, window_params = [{transform_indices = @transform_0, window_bounds = array<i64: 8, 128>}, {transform_indices = @transform_1, window_bounds = array<i64: 8, 128>}, {transform_indices = @transform_2, window_bounds = array<i64: 1, 1, 128>}]} {
    %0 = tpu.iota {dimensions = array<i32: 1>} : vector<1x128xi32>
    %c32_i32 = arith.constant 32 : i32
    %c0_i32 = arith.constant 0 : i32
    %1 = arith.cmpi eq, %c32_i32, %c0_i32 : i32
    %c1_i32 = arith.constant 1 : i32
    %2 = arith.select %1, %c1_i32, %c32_i32 : i32
    %3 = vector.broadcast %2 : i32 to vector<1x128xi32>
    %4 = arith.remsi %0, %3 : vector<1x128xi32>
    %c0_i32_0 = arith.constant 0 : i32
    %5 = vector.broadcast %c0_i32_0 : i32 to vector<1x128xi32>
    %6 = arith.cmpi ne, %4, %5 : vector<1x128xi32>
    %c0_i32_1 = arith.constant 0 : i32
    %7 = vector.broadcast %c0_i32_1 : i32 to vector<1x128xi32>
    %8 = arith.cmpi slt, %4, %7 : vector<1x128xi32>
    %c0_i32_2 = arith.constant 0 : i32
    %9 = arith.cmpi slt, %2, %c0_i32_2 : i32
    %10 = vector.broadcast %9 : i1 to vector<1x128xi1>
    %11 = vector.broadcast %10 : vector<1x128xi1> to vector<1x128xi1>
    %12 = arith.xori %8, %11 : vector<1x128xi1>
    %13 = arith.andi %12, %6 : vector<1x128xi1>
    %14 = vector.broadcast %2 : i32 to vector<1x128xi32>
    %15 = arith.addi %4, %14 : vector<1x128xi32>
    %16 = arith.select %13, %15, %4 : vector<1x128xi1>, vector<1x128xi32>
    %c16_i32 = arith.constant 16 : i32
    %17 = vector.broadcast %c16_i32 : i32 to vector<1x128xi32>
    %18 = arith.cmpi slt, %16, %17 : vector<1x128xi32>
    %c64_i32 = arith.constant 64 : i32
    %c0_i32_3 = arith.constant 0 : i32
    %19 = arith.cmpi eq, %c64_i32, %c0_i32_3 : i32
    %c1_i32_4 = arith.constant 1 : i32
    %20 = arith.select %19, %c1_i32_4, %c64_i32 : i32
    %21 = vector.broadcast %20 : i32 to vector<1x128xi32>
    %22 = arith.remsi %0, %21 : vector<1x128xi32>
    %c0_i32_5 = arith.constant 0 : i32
    %23 = vector.broadcast %c0_i32_5 : i32 to vector<1x128xi32>
    %24 = arith.cmpi ne, %22, %23 : vector<1x128xi32>
    %c0_i32_6 = arith.constant 0 : i32
    %25 = vector.broadcast %c0_i32_6 : i32 to vector<1x128xi32>
    %26 = arith.cmpi slt, %22, %25 : vector<1x128xi32>
    %c0_i32_7 = arith.constant 0 : i32
    %27 = arith.cmpi slt, %20, %c0_i32_7 : i32
    %28 = vector.broadcast %27 : i1 to vector<1x128xi1>
    %29 = vector.broadcast %28 : vector<1x128xi1> to vector<1x128xi1>
    %30 = arith.xori %26, %29 : vector<1x128xi1>
    %31 = arith.andi %30, %24 : vector<1x128xi1>
    %32 = vector.broadcast %20 : i32 to vector<1x128xi32>
    %33 = arith.addi %22, %32 : vector<1x128xi32>
    %34 = arith.select %31, %33, %22 : vector<1x128xi1>, vector<1x128xi32>
    %c32_i32_8 = arith.constant 32 : i32
    %35 = vector.broadcast %c32_i32_8 : i32 to vector<1x128xi32>
    %36 = arith.cmpi slt, %34, %35 : vector<1x128xi32>
    %c128_i32 = arith.constant 128 : i32
    %c0_i32_9 = arith.constant 0 : i32
    %37 = arith.cmpi eq, %c128_i32, %c0_i32_9 : i32
    %c1_i32_10 = arith.constant 1 : i32
    %38 = arith.select %37, %c1_i32_10, %c128_i32 : i32
    %39 = vector.broadcast %38 : i32 to vector<1x128xi32>
    %40 = arith.remsi %0, %39 : vector<1x128xi32>
    %c0_i32_11 = arith.constant 0 : i32
    %41 = vector.broadcast %c0_i32_11 : i32 to vector<1x128xi32>
    %42 = arith.cmpi ne, %40, %41 : vector<1x128xi32>
    %c0_i32_12 = arith.constant 0 : i32
    %43 = vector.broadcast %c0_i32_12 : i32 to vector<1x128xi32>
    %44 = arith.cmpi slt, %40, %43 : vector<1x128xi32>
    %c0_i32_13 = arith.constant 0 : i32
    %45 = arith.cmpi slt, %38, %c0_i32_13 : i32
    %46 = vector.broadcast %45 : i1 to vector<1x128xi1>
    %47 = vector.broadcast %46 : vector<1x128xi1> to vector<1x128xi1>
    %48 = arith.xori %44, %47 : vector<1x128xi1>
    %49 = arith.andi %48, %42 : vector<1x128xi1>
    %50 = vector.broadcast %38 : i32 to vector<1x128xi32>
    %51 = arith.addi %40, %50 : vector<1x128xi32>
    %52 = arith.select %49, %51, %40 : vector<1x128xi1>, vector<1x128xi32>
    %c64_i32_14 = arith.constant 64 : i32
    %53 = vector.broadcast %c64_i32_14 : i32 to vector<1x128xi32>
    %54 = arith.cmpi slt, %52, %53 : vector<1x128xi32>
    %c8_i32 = arith.constant 8 : i32
    %c0_i32_15 = arith.constant 0 : i32
    %55 = arith.cmpi eq, %c8_i32, %c0_i32_15 : i32
    %c1_i32_16 = arith.constant 1 : i32
    %56 = arith.select %55, %c1_i32_16, %c8_i32 : i32
    %57 = vector.broadcast %56 : i32 to vector<1x128xi32>
    %58 = arith.remsi %0, %57 : vector<1x128xi32>
    %c0_i32_17 = arith.constant 0 : i32
    %59 = vector.broadcast %c0_i32_17 : i32 to vector<1x128xi32>
    %60 = arith.cmpi ne, %58, %59 : vector<1x128xi32>
    %c0_i32_18 = arith.constant 0 : i32
    %61 = vector.broadcast %c0_i32_18 : i32 to vector<1x128xi32>
    %62 = arith.cmpi slt, %58, %61 : vector<1x128xi32>
    %c0_i32_19 = arith.constant 0 : i32
    %63 = arith.cmpi slt, %56, %c0_i32_19 : i32
    %64 = vector.broadcast %63 : i1 to vector<1x128xi1>
    %65 = vector.broadcast %64 : vector<1x128xi1> to vector<1x128xi1>
    %66 = arith.xori %62, %65 : vector<1x128xi1>
    %67 = arith.andi %66, %60 : vector<1x128xi1>
    %68 = vector.broadcast %56 : i32 to vector<1x128xi32>
    %69 = arith.addi %58, %68 : vector<1x128xi32>
    %70 = arith.select %67, %69, %58 : vector<1x128xi1>, vector<1x128xi32>
    %c4_i32 = arith.constant 4 : i32
    %71 = vector.broadcast %c4_i32 : i32 to vector<1x128xi32>
    %72 = arith.cmpi slt, %70, %71 : vector<1x128xi32>
    %c4_i32_20 = arith.constant 4 : i32
    %c0_i32_21 = arith.constant 0 : i32
    %73 = arith.cmpi eq, %c4_i32_20, %c0_i32_21 : i32
    %c1_i32_22 = arith.constant 1 : i32
    %74 = arith.select %73, %c1_i32_22, %c4_i32_20 : i32
    %75 = vector.broadcast %74 : i32 to vector<1x128xi32>
    %76 = arith.remsi %0, %75 : vector<1x128xi32>
    %c0_i32_23 = arith.constant 0 : i32
    %77 = vector.broadcast %c0_i32_23 : i32 to vector<1x128xi32>
    %78 = arith.cmpi ne, %76, %77 : vector<1x128xi32>
    %c0_i32_24 = arith.constant 0 : i32
    %79 = vector.broadcast %c0_i32_24 : i32 to vector<1x128xi32>
    %80 = arith.cmpi slt, %76, %79 : vector<1x128xi32>
    %c0_i32_25 = arith.constant 0 : i32
    %81 = arith.cmpi slt, %74, %c0_i32_25 : i32
    %82 = vector.broadcast %81 : i1 to vector<1x128xi1>
    %83 = vector.broadcast %82 : vector<1x128xi1> to vector<1x128xi1>
    %84 = arith.xori %80, %83 : vector<1x128xi1>
    %85 = arith.andi %84, %78 : vector<1x128xi1>
    %86 = vector.broadcast %74 : i32 to vector<1x128xi32>
    %87 = arith.addi %76, %86 : vector<1x128xi32>
    %88 = arith.select %85, %87, %76 : vector<1x128xi1>, vector<1x128xi32>
    %c2_i32 = arith.constant 2 : i32
    %89 = vector.broadcast %c2_i32 : i32 to vector<1x128xi32>
    %90 = arith.cmpi slt, %88, %89 : vector<1x128xi32>
    %c2_i32_26 = arith.constant 2 : i32
    %c0_i32_27 = arith.constant 0 : i32
    %91 = arith.cmpi eq, %c2_i32_26, %c0_i32_27 : i32
    %c1_i32_28 = arith.constant 1 : i32
    %92 = arith.select %91, %c1_i32_28, %c2_i32_26 : i32
    %93 = vector.broadcast %92 : i32 to vector<1x128xi32>
    %94 = arith.remsi %0, %93 : vector<1x128xi32>
    %c0_i32_29 = arith.constant 0 : i32
    %95 = vector.broadcast %c0_i32_29 : i32 to vector<1x128xi32>
    %96 = arith.cmpi ne, %94, %95 : vector<1x128xi32>
    %c0_i32_30 = arith.constant 0 : i32
    %97 = vector.broadcast %c0_i32_30 : i32 to vector<1x128xi32>
    %98 = arith.cmpi slt, %94, %97 : vector<1x128xi32>
    %c0_i32_31 = arith.constant 0 : i32
    %99 = arith.cmpi slt, %92, %c0_i32_31 : i32
    %100 = vector.broadcast %99 : i1 to vector<1x128xi1>
    %101 = vector.broadcast %100 : vector<1x128xi1> to vector<1x128xi1>
    %102 = arith.xori %98, %101 : vector<1x128xi1>
    %103 = arith.andi %102, %96 : vector<1x128xi1>
    %104 = vector.broadcast %92 : i32 to vector<1x128xi32>
    %105 = arith.addi %94, %104 : vector<1x128xi32>
    %106 = arith.select %103, %105, %94 : vector<1x128xi1>, vector<1x128xi32>
    %c0_i32_32 = arith.constant 0 : i32
    %107 = vector.broadcast %c0_i32_32 : i32 to vector<1x128xi32>
    %108 = arith.cmpi eq, %106, %107 : vector<1x128xi32>
    %109 = arith.extui %108 : vector<1x128xi1> to vector<1x128xi32>
    %110 = arith.sitofp %109 : vector<1x128xi32> to vector<1x128xf32>
    %c0 = arith.constant 0 : index
    %c0_33 = arith.constant 0 : index
    %111 = vector.load %arg1[%c0, %c0_33] : memref<8x128xf32, #tpu.memory_space<vmem>>, vector<8x128xf32>
    %c0_34 = arith.constant 0 : index
    %c0_35 = arith.constant 0 : index
    %112 = vector.load %arg2[%c0_34, %c0_35] : memref<8x128xf32, #tpu.memory_space<vmem>>, vector<8x128xf32>
    %113 = arith.subf %111, %112 : vector<8x128xf32>
    %c112_i32 = arith.constant 112 : i32
    %114 = tpu.dynamic_rotate %113 by %c112_i32 dim 1 : vector<8x128xf32>, i32 -> vector<8x128xf32>
    %c16_i32_36 = arith.constant 16 : i32
    %115 = tpu.dynamic_rotate %113 by %c16_i32_36 dim 1 : vector<8x128xf32>, i32 -> vector<8x128xf32>
    %116 = arith.addf %113, %114 : vector<8x128xf32>
    %117 = arith.subf %115, %113 : vector<8x128xf32>
    %118 = vector.shape_cast %18 : vector<1x128xi1> to vector<1x128xi1>
    %119 = vector.broadcast %118 : vector<1x128xi1> to vector<8x128xi1>
    %120 = arith.select %119, %116, %117 : vector<8x128xi1>, vector<8x128xf32>
    %c96_i32 = arith.constant 96 : i32
    %121 = tpu.dynamic_rotate %120 by %c96_i32 dim 1 : vector<8x128xf32>, i32 -> vector<8x128xf32>
    %c32_i32_37 = arith.constant 32 : i32
    %122 = tpu.dynamic_rotate %120 by %c32_i32_37 dim 1 : vector<8x128xf32>, i32 -> vector<8x128xf32>
    %123 = arith.addf %120, %121 : vector<8x128xf32>
    %124 = arith.subf %122, %120 : vector<8x128xf32>
    %125 = vector.shape_cast %36 : vector<1x128xi1> to vector<1x128xi1>
    %126 = vector.broadcast %125 : vector<1x128xi1> to vector<8x128xi1>
    %127 = arith.select %126, %123, %124 : vector<8x128xi1>, vector<8x128xf32>
    %c64_i32_38 = arith.constant 64 : i32
    %128 = tpu.dynamic_rotate %127 by %c64_i32_38 dim 1 : vector<8x128xf32>, i32 -> vector<8x128xf32>
    %c64_i32_39 = arith.constant 64 : i32
    %129 = tpu.dynamic_rotate %127 by %c64_i32_39 dim 1 : vector<8x128xf32>, i32 -> vector<8x128xf32>
    %130 = arith.addf %127, %128 : vector<8x128xf32>
    %131 = arith.subf %129, %127 : vector<8x128xf32>
    %132 = vector.shape_cast %54 : vector<1x128xi1> to vector<1x128xi1>
    %133 = vector.broadcast %132 : vector<1x128xi1> to vector<8x128xi1>
    %134 = arith.select %133, %130, %131 : vector<8x128xi1>, vector<8x128xf32>
    %c124_i32 = arith.constant 124 : i32
    %135 = tpu.dynamic_rotate %134 by %c124_i32 dim 1 : vector<8x128xf32>, i32 -> vector<8x128xf32>
    %c4_i32_40 = arith.constant 4 : i32
    %136 = tpu.dynamic_rotate %134 by %c4_i32_40 dim 1 : vector<8x128xf32>, i32 -> vector<8x128xf32>
    %137 = arith.addf %134, %135 : vector<8x128xf32>
    %138 = arith.subf %136, %134 : vector<8x128xf32>
    %139 = vector.shape_cast %72 : vector<1x128xi1> to vector<1x128xi1>
    %140 = vector.broadcast %139 : vector<1x128xi1> to vector<8x128xi1>
    %141 = arith.select %140, %137, %138 : vector<8x128xi1>, vector<8x128xf32>
    %c126_i32 = arith.constant 126 : i32
    %142 = tpu.dynamic_rotate %141 by %c126_i32 dim 1 : vector<8x128xf32>, i32 -> vector<8x128xf32>
    %c2_i32_41 = arith.constant 2 : i32
    %143 = tpu.dynamic_rotate %141 by %c2_i32_41 dim 1 : vector<8x128xf32>, i32 -> vector<8x128xf32>
    %144 = arith.addf %141, %142 : vector<8x128xf32>
    %145 = arith.subf %143, %141 : vector<8x128xf32>
    %146 = vector.shape_cast %90 : vector<1x128xi1> to vector<1x128xi1>
    %147 = vector.broadcast %146 : vector<1x128xi1> to vector<8x128xi1>
    %148 = arith.select %147, %144, %145 : vector<8x128xi1>, vector<8x128xf32>
    %149 = math.absf %148 : vector<8x128xf32>
    %c127_i32 = arith.constant 127 : i32
    %150 = tpu.dynamic_rotate %149 by %c127_i32 dim 1 : vector<8x128xf32>, i32 -> vector<8x128xf32>
    %151 = arith.maximumf %149, %150 : vector<8x128xf32>
    %cst = arith.constant dense<0.000000e+00> : vector<128xf32>
    %152 = vector.multi_reduction <add>, %151, %cst [0] : vector<8x128xf32> to vector<128xf32>
    %153 = vector.shape_cast %152 : vector<128xf32> to vector<1x128xf32>
    %154 = arith.mulf %153, %110 : vector<1x128xf32>
    %c0_42 = arith.constant 0 : index
    %c0_43 = arith.constant 0 : index
    %c0_44 = arith.constant 0 : index
    %155 = vector.load %arg3[%c0_42, %c0_43, %c0_44] : memref<1x1x128xf32, #tpu.memory_space<vmem>>, vector<1x1x128xf32>
    %156 = vector.shape_cast %155 : vector<1x1x128xf32> to vector<1x128xf32>
    %157 = vector.shape_cast %154 : vector<1x128xf32> to vector<1x1x128xf32>
    tpu.vector_store %arg3[%c0_42, %c0_43, %c0_44], %157 {strides = array<i32>} : memref<1x1x128xf32, #tpu.memory_space<vmem>>, vector<1x1x128xf32>,
    return
  }
  func.func @transform_0(%arg0: i32) -> (i32, i32) {
    %c0_i32 = arith.constant 0 : i32
    %c0_i32_0 = arith.constant 0 : i32
    return %arg0, %c0_i32 : i32, i32
  }
  func.func @transform_1(%arg0: i32) -> (i32, i32) {
    %c0_i32 = arith.constant 0 : i32
    %c0_i32_0 = arith.constant 0 : i32
    return %arg0, %c0_i32 : i32, i32
  }
  func.func @transform_2(%arg0: i32) -> (i32, i32, i32) {
    %c0_i32 = arith.constant 0 : i32
    %c0_i32_0 = arith.constant 0 : i32
    %c0_i32_1 = arith.constant 0 : i32
    return %arg0, %c0_i32, %c0_i32_0 : i32, i32, i32
  }
}

</mosaic_0001>

<llo_original>
// kernel: tpu_custom_call.1
$region0: #{tpu_custom_call.1}
  #allocation0 [shape = 'u32[]', space=smem, size = 0x4, offset = 0x4, fixed_abs, tag = 'smem constant byte address 0x4 - core index']
  #allocation1 [shape = 'u32[144,128]{1,0:T(1,128)}', space=vmem, size = 0x12000, scoped, tag = 'internal scratch']
  %s0 = inlined_call_operand.hbm [shape: f32[16,128], index: 0, kind: input, shape index: {}]
  %s1 = inlined_call_operand.hbm [shape: f32[16,128], index: 1, kind: input, shape index: {}]
  %s2 = inlined_call_operand.hbm [shape: f32[2,1,128], index: 2, kind: output, shape index: {}]
  %s3 = sld [smem:[#allocation0]]
  $region49: #{tpu_custom_call.1} parent=0
    _
  %s5 = ssub.s32 1, %s3
  %s6 = scalar_select 0, %s5, %s3
  $region1: #{tpu_custom_call.1} parent=0
    #allocation2 [shape = 'u8[8192]{0}', space=vmem, size = 0x2000, scoped, tag = 'input window, operand 0']
    #allocation3 [shape = 's32[2]{0}', space=sflag, size = 0x8, scoped, tag = 'scoped memory for tpu_custom_call.1']
    #allocation4 [shape = 's32[2]{0}', space=sflag, size = 0x8, scoped, tag = 'scoped memory for tpu_custom_call.1']
    #allocation5 [shape = 'u8[8192]{0}', space=vmem, size = 0x2000, scoped, tag = 'input window, operand 1']
    #allocation6 [shape = 's32[2]{0}', space=sflag, size = 0x8, scoped, tag = 'scoped memory for tpu_custom_call.1']
    #allocation7 [shape = 'u8[1024]{0}', space=vmem, size = 0x400, scoped, tag = 'output window, operand 0']
    %7 = vsyncpa [#allocation3], 0
    %s8 = scalar_lea.sflag [#allocation3], 1
    %9 = vsyncpa %s8, 0
    %10 = vsyncpa [#allocation6], 0
    %s11 = scalar_lea.sflag [#allocation6], 1
    %12 = vsyncpa %s11, 0
    %13 = vsyncpa [#allocation4], 0
    %s14 = scalar_lea.sflag [#allocation4], 1
    %15 = vsyncpa %s14, 0
    loop: start=0, step=1, limit=4
    $region2: #{tpu_custom_call.1} parent=1 // loop_pre_header
      _
    $region3: #{tpu_custom_call.1} parent=1 // loop_header
      %s17 = sphi 0, %s21
      %p18 = scmp.ge.s32.totalorder %s17, 4
      %s27 = sphi 0, %s29
      %s30 = sphi 0, %s27
      %s31 = sphi 0, %s30
      %s47 = sphi 0, %s31
      %s53 = sphi 0, %s55
      %s56 = sphi 0, %s53
      %s57 = sphi 0, %s56
      %s73 = sphi 0, %s57
      %s79 = sphi 0, %s81
      %s82 = sphi 0, %s79
      %s83 = sphi 0, %s82
      %s99 = sphi 0, %s83
    $region4: #{tpu_custom_call.1} parent=1 // loop_header_branch
      %20 = sbr.rel (%p18) target = $region8
    $region5: #{tpu_custom_call.1} parent=1 // loop_body
      %s22 = ssub.s32 %s17, 1
      %s23 = ssub.s32 %s17, 2
      %s24 = sadd.s32 %s17, 1
      %s25 = ssub.s32 %s17, %s24
      %p26 = scmp.eq.s32.totalorder %s25, 0
      %s28 = sadd.s32 %s27, 1
      %s29 = scalar_select %p26, %s27, %s28
      %p32 = pneg %p26
      %p33 = scmp.eq.s32.totalorder %s17, 1
      %p34 = por %p32, %p33
      %p35 = scmp.ne.s32.totalorder %s27, %s30
      %p36 = scmp.eq.s32.totalorder %s17, 0
      %p37 = por %p35, %p36
      %p38 = scmp.ne.s32.totalorder %s27, %s30
      %p39 = scmp.eq.s32.totalorder %s22, 1
      %p40 = por %p38, %p39
      %p41 = scmp.ne.s32.totalorder %s30, %s31
      %p42 = scmp.eq.s32.totalorder %s22, 0
      %p43 = por %p41, %p42
      %p44 = scmp.ne.s32.totalorder %s30, %s31
      %p45 = scmp.eq.s32.totalorder %s23, 1
      %p46 = por %p44, %p45
      %p48 = scmp.ne.s32.totalorder %s31, %s47
      %p49 = scmp.eq.s32.totalorder %s23, 0
      %p50 = por %p48, %p49
      %s51 = ssub.s32 %s17, %s24
      %p52 = scmp.eq.s32.totalorder %s51, 0
      %s54 = sadd.s32 %s53, 1
      %s55 = scalar_select %p52, %s53, %s54
      %p58 = pneg %p52
      %p59 = scmp.eq.s32.totalorder %s17, 1
      %p60 = por %p58, %p59
      %p61 = scmp.ne.s32.totalorder %s53, %s56
      %p62 = scmp.eq.s32.totalorder %s17, 0
      %p63 = por %p61, %p62
      %p64 = scmp.ne.s32.totalorder %s53, %s56
      %p65 = scmp.eq.s32.totalorder %s22, 1
      %p66 = por %p64, %p65
      %p67 = scmp.ne.s32.totalorder %s56, %s57
      %p68 = scmp.eq.s32.totalorder %s22, 0
      %p69 = por %p67, %p68
      %p70 = scmp.ne.s32.totalorder %s56, %s57
      %p71 = scmp.eq.s32.totalorder %s23, 1
      %p72 = por %p70, %p71
      %p74 = scmp.ne.s32.totalorder %s57, %s73
      %p75 = scmp.eq.s32.totalorder %s23, 0
      %p76 = por %p74, %p75
      %s77 = ssub.s32 %s17, %s24
      %p78 = scmp.eq.s32.totalorder %s77, 0
      %s80 = sadd.s32 %s79, 1
      %s81 = scalar_select %p78, %s79, %s80
      %p84 = pneg %p78
      %p85 = scmp.eq.s32.totalorder %s17, 1
      %p86 = por %p84, %p85
      %p87 = scmp.ne.s32.totalorder %s79, %s82
      %p88 = scmp.eq.s32.totalorder %s17, 0
      %p89 = por %p87, %p88
      %p90 = scmp.ne.s32.totalorder %s79, %s82
      %p91 = scmp.eq.s32.totalorder %s22, 1
      %p92 = por %p90, %p91
      %p93 = scmp.ne.s32.totalorder %s82, %s83
      %p94 = scmp.eq.s32.totalorder %s22, 0
      %p95 = por %p93, %p94
      %p96 = scmp.ne.s32.totalorder %s82, %s83
      %p97 = scmp.eq.s32.totalorder %s23, 1
      %p98 = por %p96, %p97
      %p100 = scmp.ne.s32.totalorder %s83, %s99
      %p101 = scmp.eq.s32.totalorder %s23, 0
      %p102 = por %p100, %p101
      %p103 = scmp.le.s32.totalorder 1, %s17
      %p104 = scmp.lt.s32.totalorder %s17, 3
      %p105 = pnand %p103, %p104
      %p106 = pneg %p105
      // Predicated region
      $region9: #{tpu_custom_call.1} parent=5 // pred_check
        _
      $region10: #{tpu_custom_call.1} parent=5 // pred_check_branch
        %108 = sbr.rel (%p105) target = $region12
      $region11: #{tpu_custom_call.1} parent=5 // pred_region
        %s109 = ssub.s32 %s17, 1
      $region12: #{tpu_custom_call.1} parent=5 // pred_fallthru
        _
      %p110 = scmp.lt.s32.totalorder %s17, 2
      // Predicated region
      $region13: #{tpu_custom_call.1} parent=5 // pred_check
        %p111 = pneg %p110
      $region14: #{tpu_custom_call.1} parent=5 // pred_check_branch
        %113 = sbr.rel (%p111) target = $region16
      $region15: #{tpu_custom_call.1} parent=5 // pred_region
        // Predicated region
        $region17: #{tpu_custom_call.1} parent=15 // pred_check
          %p114 = pneg %p37
        $region18: #{tpu_custom_call.1} parent=15 // pred_check_branch
          %116 = sbr.rel (%p114) target = $region20
        $region19: #{tpu_custom_call.1} parent=15 // pred_region
          %s117 = sand.u32 %s27, 1
          %s118 = scalar_lea.sflag [#allocation3], %s117
          %s119 = sand.u32 %s27, 1
          %s120 = smul.addr %s119, 8
          %s121 = scalar_lea.vmem [#allocation2], %s120
          %s123 = ssub.s32 128, 128
          %124 = vsyncadd %s118, %s123
          %s125 = smul.addr %s17, 128
          %s126 = scalar_lea.hbm %s0, %s125
          %s128 = sshll.u32 %s121, 4
          %s129 = int_to_ptr.vmem [resolvable:$true] %s128
          %131 = dma.hbm_to_vmem [thread:$0]  %s126, 128, %s129, %s118
        $region20: #{tpu_custom_call.1} parent=15 // pred_fallthru
          _
        // Predicated region
        $region21: #{tpu_custom_call.1} parent=15 // pred_check
          %p132 = pneg %p63
        $region22: #{tpu_custom_call.1} parent=15 // pred_check_branch
          %134 = sbr.rel (%p132) target = $region24
        $region23: #{tpu_custom_call.1} parent=15 // pred_region
          %s135 = sand.u32 %s53, 1
          %s136 = scalar_lea.sflag [#allocation6], %s135
          %s137 = sand.u32 %s53, 1
          %s138 = smul.addr %s137, 8
          %s139 = scalar_lea.vmem [#allocation5], %s138
          %s141 = ssub.s32 128, 128
          %142 = vsyncadd %s136, %s141
          %s143 = smul.addr %s17, 128
          %s144 = scalar_lea.hbm %s1, %s143
          %s146 = sshll.u32 %s139, 4
          %s147 = int_to_ptr.vmem [resolvable:$true] %s146
          %149 = dma.hbm_to_vmem [thread:$0]  %s144, 128, %s147, %s136
        $region24: #{tpu_custom_call.1} parent=15 // pred_fallthru
          _
      $region16: #{tpu_custom_call.1} parent=5 // pred_fallthru
        _
      %p150 = scmp.le.s32.totalorder 1, %s17
      %p151 = scmp.lt.s32.totalorder %s17, 3
      %p152 = pnand %p150, %p151
      %p153 = pneg %p152
      // Predicated region
      $region25: #{tpu_custom_call.1} parent=5 // pred_check
        _
      $region26: #{tpu_custom_call.1} parent=5 // pred_check_branch
        %155 = sbr.rel (%p152) target = $region28
      $region27: #{tpu_custom_call.1} parent=5 // pred_region
        %s156 = ssub.s32 %s17, 1
        %s157 = sand.u32 %s30, 1
        %s158 = scalar_lea.sflag [#allocation3], %s157
        %s159 = sand.u32 %s30, 1
        %s160 = smul.addr %s159, 8
        %s161 = scalar_lea.vmem [#allocation2], %s160
        // Predicated region
        $region29: #{tpu_custom_call.1} parent=27 // pred_check
          %p162 = pneg %p43
        $region30: #{tpu_custom_call.1} parent=27 // pred_check_branch
          %164 = sbr.rel (%p162) target = $region32
        $region31: #{tpu_custom_call.1} parent=27 // pred_region
          %165 = dma.done %s158, 128
        $region32: #{tpu_custom_call.1} parent=27 // pred_fallthru
          _
        %s166 = sand.u32 %s56, 1
        %s167 = scalar_lea.sflag [#allocation6], %s166
        %s168 = sand.u32 %s56, 1
        %s169 = smul.addr %s168, 8
        %s170 = scalar_lea.vmem [#allocation5], %s169
        // Predicated region
        $region33: #{tpu_custom_call.1} parent=27 // pred_check
          %p171 = pneg %p69
        $region34: #{tpu_custom_call.1} parent=27 // pred_check_branch
          %173 = sbr.rel (%p171) target = $region36
        $region35: #{tpu_custom_call.1} parent=27 // pred_region
          %174 = dma.done %s167, 128
        $region36: #{tpu_custom_call.1} parent=27 // pred_fallthru
          _
        %s175 = sand.u32 %s30, 1
        %s176 = scalar_lea.sflag [#allocation3], %s175
        %s177 = sand.u32 %s30, 1
        %s178 = smul.addr %s177, 8
        %s179 = scalar_lea.vmem [#allocation2], %s178
        %p180 = pneg %p43
        %p181 = pneg %p40
        %s182 = sand.u32 %s56, 1
        %s183 = scalar_lea.sflag [#allocation6], %s182
        %s184 = sand.u32 %s56, 1
        %s185 = smul.addr %s184, 8
        %s186 = scalar_lea.vmem [#allocation5], %s185
        %p187 = pneg %p69
        %p188 = pneg %p66
        %p189 = pneg %p95
        %p190 = pneg %p92
        %s191 = sand.u32 %s82, 1
        %s192 = scalar_lea.sflag [#allocation4], %s191
        %s193 = sand.u32 %s82, 1
        %s194 = scalar_lea.vmem [#allocation7], %s193
        %v195 = vlaneseq
        %v196 = vand.u32 %v195, 127
        %vm197 = vcmp.lt.s32.totalorder %v196, 0
        %v198 = vsub.s32 0, %v196
        %v199 = vsel %vm197, %v198, %v196
        %v200 = vshrl.u32 %v199, 5
        %v201 = vand.u32 %v199, 31
        %v202 = vsub.s32 0, %v201
        %v203 = vsel %vm197, %v202, %v201
        %vm204 = vcmp.ne.s32.totalorder %v203, 0
        %vm205 = vcmp.lt.s32.totalorder %v203, 0
        %vm206 = vmand %vm205, %vm204
        %v207 = vadd.s32 %v203, 32
        %v208 = vsel %vm206, %v207, %v203
        %vm209 = vcmp.lt.s32.totalorder %v208, 16
        %vm210 = vcmp.lt.s32.totalorder %v196, 0
        %v211 = vsub.s32 0, %v196
        %v212 = vsel %vm210, %v211, %v196
        %v213 = vshrl.u32 %v212, 6
        %v214 = vand.u32 %v212, 63
        %v215 = vsub.s32 0, %v214
        %v216 = vsel %vm210, %v215, %v214
        %vm217 = vcmp.ne.s32.totalorder %v216, 0
        %vm218 = vcmp.lt.s32.totalorder %v216, 0
        %vm219 = vmand %vm218, %vm217
        %v220 = vadd.s32 %v216, 64
        %v221 = vsel %vm219, %v220, %v216
        %vm222 = vcmp.lt.s32.totalorder %v221, 32
        %vm223 = vcmp.lt.s32.totalorder %v196, 0
        %v224 = vsub.s32 0, %v196
        %v225 = vsel %vm223, %v224, %v196
        %v226 = vshrl.u32 %v225, 7
        %v227 = vand.u32 %v225, 127
        %v228 = vsub.s32 0, %v227
        %v229 = vsel %vm223, %v228, %v227
        %vm230 = vcmp.ne.s32.totalorder %v229, 0
        %vm231 = vcmp.lt.s32.totalorder %v229, 0
        %vm232 = vmand %vm231, %vm230
        %v233 = vadd.s32 %v229, 128
        %v234 = vsel %vm232, %v233, %v229
        %vm235 = vcmp.lt.s32.totalorder %v234, 64
        %vm236 = vcmp.lt.s32.totalorder %v196, 0
        %v237 = vsub.s32 0, %v196
        %v238 = vsel %vm236, %v237, %v196
        %v239 = vshrl.u32 %v238, 3
        %v240 = vand.u32 %v238, 7
        %v241 = vsub.s32 0, %v240
        %v242 = vsel %vm236, %v241, %v240
        %vm243 = vcmp.ne.s32.totalorder %v242, 0
        %vm244 = vcmp.lt.s32.totalorder %v242, 0
        %vm245 = vmand %vm244, %vm243
        %v246 = vadd.s32 %v242, 8
        %v247 = vsel %vm245, %v246, %v242
        %vm248 = vcmp.lt.s32.totalorder %v247, 4
        %vm249 = vcmp.lt.s32.totalorder %v196, 0
        %v250 = vsub.s32 0, %v196
        %v251 = vsel %vm249, %v250, %v196
        %v252 = vshrl.u32 %v251, 2
        %v253 = vand.u32 %v251, 3
        %v254 = vsub.s32 0, %v253
        %v255 = vsel %vm249, %v254, %v253
        %vm256 = vcmp.ne.s32.totalorder %v255, 0
        %vm257 = vcmp.lt.s32.totalorder %v255, 0
        %vm258 = vmand %vm257, %vm256
        %v259 = vadd.s32 %v255, 4
        %v260 = vsel %vm258, %v259, %v255
        %vm261 = vcmp.lt.s32.totalorder %v260, 2
        %vm262 = vcmp.lt.s32.totalorder %v196, 0
        %v263 = vsub.s32 0, %v196
        %v264 = vsel %vm262, %v263, %v196
        %v265 = vshrl.u32 %v264, 1
        %v266 = vand.u32 %v264, 1
        %v267 = vsub.s32 0, %v266
        %v268 = vsel %vm262, %v267, %v266
        %vm269 = vcmp.ne.s32.totalorder %v268, 0
        %vm270 = vcmp.lt.s32.totalorder %v268, 0
        %vm271 = vmand %vm270, %vm269
        %v272 = vadd.s32 %v268, 2
        %v273 = vsel %vm271, %v272, %v268
        %vm274 = vcmp.eq.s32.totalorder %v273, 0
        %v275 = vsel %vm274, 1, 0
        %v276 = vcvt.s32.f32 %v275
        %v277 = vld [vmem:[%s161] sm:$0xff]
        %v278 = vld [vmem:[%s170] sm:$0xff]
        %v279 = vsub.f32 %v277, %v278
        %280 = vrot.lane.b32.xlu0 %v279, 112
        %v281 = vpop.permute.xlu0 %280
        %282 = vrot.lane.b32.xlu0 %v279, 16
        %v283 = vpop.permute.xlu0 %282
        %v284 = vadd.f32 %v279, %v281
        %v285 = vsub.f32 %v283, %v279
        %v286 = vsel %vm209, 1, 0
        %vm287 = vcmp.eq.s32.totalorder %v286, 1
        %v288 = vsel %vm287, %v284, %v285
        %289 = vrot.lane.b32.xlu0 %v288, 96
        %v290 = vpop.permute.xlu0 %289
        %291 = vrot.lane.b32.xlu0 %v288, 32
        %v292 = vpop.permute.xlu0 %291
        %v293 = vadd.f32 %v288, %v290
        %v294 = vsub.f32 %v292, %v288
        %v295 = vsel %vm222, 1, 0
        %vm296 = vcmp.eq.s32.totalorder %v295, 1
        %v297 = vsel %vm296, %v293, %v294
        %298 = vrot.lane.b32.xlu0 %v297, 64
        %v299 = vpop.permute.xlu0 %298
        %v300 = vadd.f32 %v297, %v299
        %v301 = vsub.f32 %v299, %v297
        %v302 = vsel %vm235, 1, 0
        %vm303 = vcmp.eq.s32.totalorder %v302, 1
        %v304 = vsel %vm303, %v300, %v301
        %305 = vrot.lane.b32.xlu0 %v304, 124
        %v306 = vpop.permute.xlu0 %305
        %307 = vrot.lane.b32.xlu0 %v304, 4
        %v308 = vpop.permute.xlu0 %307
        %v309 = vadd.f32 %v304, %v306
        %v310 = vsub.f32 %v308, %v304
        %v311 = vsel %vm248, 1, 0
        %vm312 = vcmp.eq.s32.totalorder %v311, 1
        %v313 = vsel %vm312, %v309, %v310
        %314 = vrot.lane.b32.xlu0 %v313, 126
        %v315 = vpop.permute.xlu0 %314
        %316 = vrot.lane.b32.xlu0 %v313, 2
        %v317 = vpop.permute.xlu0 %316
        %v318 = vadd.f32 %v313, %v315
        %v319 = vsub.f32 %v317, %v313
        %v320 = vsel %vm261, 1, 0
        %vm321 = vcmp.eq.s32.totalorder %v320, 1
        %v322 = vsel %vm321, %v318, %v319
        %v323 = vand.u32 2147483647, %v322
        %324 = vrot.lane.b32.xlu0 %v323, 127
        %v325 = vpop.permute.xlu0 %324
        %v326 = vmax.f32 %v323, %v325
        %v327 = vrot.slane %v326, 4
        %v328 = vadd.f32 %v326, %v327
        %v329 = vrot.slane %v328, 2
        %v330 = vadd.f32 %v328, %v329
        %v331 = vrot.slane %v330, 1
        %v332 = vadd.f32 %v330, %v331
        %v333 = vmul.f32 %v332, %v276
        %334 = vst [vmem:[%s194] sm:$0x1] %v333
        %s335 = sand.u32 %s82, 1
        %s336 = scalar_lea.sflag [#allocation4], %s335
        %s337 = sand.u32 %s82, 1
        %s338 = scalar_lea.vmem [#allocation7], %s337
        // Predicated region
        $region37: #{tpu_custom_call.1} parent=27 // pred_check
          %p339 = pneg %p92
        $region38: #{tpu_custom_call.1} parent=27 // pred_check_branch
          %341 = sbr.rel (%p339) target = $region40
        $region39: #{tpu_custom_call.1} parent=27 // pred_region
          %s343 = ssub.s32 16, 16
          %344 = vsyncadd %s336, %s343
          %s345 = smul.addr %s22, 16
          %s346 = scalar_lea.hbm %s2, %s345
          %s348 = sshll.u32 %s338, 4
          %s349 = int_to_ptr.vmem [resolvable:$true] %s348
          %351 = dma.vmem_to_hbm [thread:$0]  %s349, 16, %s346, %s336
        $region40: #{tpu_custom_call.1} parent=27 // pred_fallthru
          _
      $region28: #{tpu_custom_call.1} parent=5 // pred_fallthru
        _
      %p352 = scmp.le.s32.totalorder 2, %s17
      // Predicated region
      $region41: #{tpu_custom_call.1} parent=5 // pred_check
        %p353 = pneg %p352
      $region42: #{tpu_custom_call.1} parent=5 // pred_check_branch
        %355 = sbr.rel (%p353) target = $region44
      $region43: #{tpu_custom_call.1} parent=5 // pred_region
        %s356 = ssub.s32 %s17, 2
        // Predicated region
        $region45: #{tpu_custom_call.1} parent=43 // pred_check
          %p357 = pneg %p98
        $region46: #{tpu_custom_call.1} parent=43 // pred_check_branch
          %359 = sbr.rel (%p357) target = $region48
        $region47: #{tpu_custom_call.1} parent=43 // pred_region
          %s360 = sand.u32 %s83, 1
          %s361 = scalar_lea.sflag [#allocation4], %s360
          %s362 = sand.u32 %s83, 1
          %s363 = scalar_lea.vmem [#allocation7], %s362
          %364 = dma.done %s361, 16
        $region48: #{tpu_custom_call.1} parent=43 // pred_fallthru
          _
      $region44: #{tpu_custom_call.1} parent=5 // pred_fallthru
        _
    $region6: #{tpu_custom_call.1} parent=1 // loop_footer
      %s21 = sadd.s32 1, %s17
    $region7: #{tpu_custom_call.1} parent=1 // loop_footer_branch
      %16 = sbr.rel target = $region3
    $region8: #{tpu_custom_call.1} parent=1 // loop_exit
      _
    %365 = vsyncpa [#allocation3], 1
    %s366 = scalar_lea.sflag [#allocation3], 1
    %367 = vsyncpa %s366, 1
    %368 = vsyncpa [#allocation6], 1
    %s369 = scalar_lea.sflag [#allocation6], 1
    %370 = vsyncpa %s369, 1
    %371 = vsyncpa [#allocation4], 1
    %s372 = scalar_lea.sflag [#allocation4], 1
    %373 = vsyncpa %s372, 1

</llo_original>
